<compile_context>
chip_gen: v7x
topology: tpu7x:2x2x1
jax: 0.10.0
libtpu: 0.0.40
codegen_flags: <defaults>
</compile_context>

<pallas_src>
import math

import jax
import jax.numpy as jnp
from jax.experimental import pallas as pl
from jax.experimental.pallas import tpu as pltpu


def make_positional_encoding(d_model: int, max_len: int = 100,
                             dtype=jnp.float32) -> jax.Array:
    """Deterministic buffer init, identical to the PyTorch __init__."""
    position = jnp.arange(max_len, dtype=jnp.float32)[:, None]            # (max_len, 1)
    div_term = jnp.exp(
        jnp.arange(0, d_model, 2, dtype=jnp.float32) * (-math.log(10000.0) / d_model)
    )                                                                      # (ceil(d/2),)
    angles = position * div_term                                           # (max_len, ceil(d/2))
    pe = jnp.zeros((max_len, d_model), dtype=jnp.float32)
    pe = pe.at[:, 0::2].set(jnp.sin(angles))
    pe = pe.at[:, 1::2].set(jnp.cos(angles[:, : d_model // 2]))            # odd d_model safe
    return pe.astype(dtype)


def prepare_pe(pe: jax.Array, seq_len: int, dtype) -> jax.Array:
    """Slice + cast + flatten once per (S, dtype), outside the hot path.

    Note: PyTorch's `x + self.pe` would promote bf16 x to f32; here pe is
    pre-cast to x.dtype (perf choice) — identical for the f32 reference.
    """
    d_model = pe.shape[1]
    return pe[:seq_len, :].astype(dtype).reshape(1, seq_len * d_model)


def _pe_add_kernel(x_ref, pe_ref, o_ref):
    # x_ref: (tb, tc) activation tile; pe_ref: (1, tc) positional-encoding tile.
    # Sublane-broadcast elementwise add (VPU); kernel is pure HBM streaming.
    o_ref[...] = x_ref[...] + pe_ref[...]


def _pad8(rows: int) -> int:
    return -(-rows // 8) * 8


def _pick_tiles(batch: int, n: int, itemsize: int, vmem_target_bytes: int):
    """Pick (tb, tc) for the flattened (B, N) view.

    Accounts for double-buffering of x-in, out, and pe, including VMEM sublane
    padding of the (1, tc) pe tile to 8 sublanes and of small tb to 8.
    Block dims are either multiples of (8, 128) or equal to the full array
    dims; partial trailing blocks (cdiv grid) are legal and masked.
    """
    def total_bytes(tb, tc):
        # 2x x-in + 2x out + 2x pe (pe padded to 8 sublanes)
        return (4 * _pad8(tb) * tc + 2 * 8 * tc) * itemsize

    # Preferred: full-width columns (fully contiguous row DMAs, pe fetched once).
    if total_bytes(min(batch, 8), n) <= vmem_target_bytes:
        tc = n
        if batch <= 8:
            tb = batch                                   # full dim -> always legal
        else:
            max_tb = (vmem_target_bytes // itemsize - 16 * tc) // (4 * tc)
            tb = min(batch, max(8, (max_tb // 8) * 8))   # largest multiple of 8 that fits
        return int(tb), int(tc)

    # N too wide even for an 8-row stripe: tile columns (128-aligned, cdiv grid).
    tb = batch if batch < 8 else 8
    max_tc = (vmem_target_bytes // itemsize) // (4 * _pad8(tb) + 16)
    tc = max(128, (max_tc // 128) * 128)
    tc = min(tc, n)                                      # defensive clamp (full dim legal)
    return int(tb), int(tc)


def positional_encoding_forward(x: jax.Array, pe_prepared: jax.Array, *,
                                vmem_target_bytes: int = 24 << 20,
                                donate_x: bool = False) -> jax.Array:
    """x: [B, S, D]; pe_prepared: [1, S*D] from prepare_pe; returns x + pe[:S]."""
    B, S, D = x.shape
    N = S * D
    assert pe_prepared.shape == (1, N), "pe_prepared must be prepare_pe(pe, S, dtype)"
    assert pe_prepared.dtype == x.dtype

    itemsize = jnp.dtype(x.dtype).itemsize
    x2 = x.reshape(B, N)                                 # contiguous row-major -> free
    tb, tc = _pick_tiles(B, N, itemsize, vmem_target_bytes)
    n_col = pl.cdiv(N, tc)                               # partial trailing block is legal
    n_b = pl.cdiv(B, tb)

    extra = {"input_output_aliases": {0: 0}} if donate_x else {}

    out2 = pl.pallas_call(
        _pe_add_kernel,
        out_shape=jax.ShapeDtypeStruct((B, N), x.dtype),
        grid_spec=pltpu.PrefetchScalarGridSpec(
            num_scalar_prefetch=0,
            # Batch innermost: pe block index only changes with the column tile,
            # so pe is DMA'd once per column tile, not once per batch tile.
            grid=(n_col, n_b),
            in_specs=[
                pl.BlockSpec((tb, tc), lambda c, b: (b, c)),   # x tile
                pl.BlockSpec((1, tc), lambda c, b: (0, c)),    # pe tile (reused)
            ],
            out_specs=pl.BlockSpec((tb, tc), lambda c, b: (b, c)),
        ),
        compiler_params=pltpu.CompilerParams(
            # Both axes are independent elementwise work -> let either feed a
            # second TensorCore on v7x (no carried state to protect).
            dimension_semantics=("parallel", "parallel"),
            # ~24 MiB of buffers + headroom; above v5e's 16 MiB default scoped
            # limit, equal to the v6e/v7x default, far under physical VMEM.
            vmem_limit_bytes=32 << 20,
        ),
        cost_estimate=pl.CostEstimate(
            flops=B * N,
            transcendentals=0,
            bytes_accessed=(2 * B * N + N) * itemsize,   # read x + write out + read pe
        ),
        **extra,
    )(x2, pe_prepared)

    return out2.reshape(B, S, D)


if __name__ == "__main__":
    MAX_LEN = 100
    key = jax.random.PRNGKey(0)
    k1, k2, k3 = jax.random.split(key, 3)

    fwd = jax.jit(positional_encoding_forward,
                  static_argnames=("vmem_target_bytes", "donate_x"))

    # Test 1: canonical small shape.
    B, S, D = 2, 8, 32
    x = jax.random.normal(k1, (B, S, D), dtype=jnp.float32)
    pe = make_positional_encoding(D, max_len=MAX_LEN, dtype=x.dtype)
    out = jax.block_until_ready(fwd(x, prepare_pe(pe, S, x.dtype)))
    ref = x + pe[:S, :]
    assert out.shape == (B, S, D) and out.dtype == x.dtype
    assert jnp.allclose(out, ref, atol=1e-6, rtol=1e-6), "test1 mismatch"

    # Test 2: N = S*D not a multiple of 128 -> full-width (equal-to-dim) block.
    B, S, D = 3, 10, 50
    x = jax.random.normal(k2, (B, S, D), dtype=jnp.float32)
    pe = make_positional_encoding(D, max_len=MAX_LEN, dtype=x.dtype)
    out = jax.block_until_ready(fwd(x, prepare_pe(pe, S, x.dtype)))
    assert jnp.allclose(out, x + pe[:S, :], atol=1e-6, rtol=1e-6), "test2 mismatch"

    # Test 3: tiny VMEM target to force 128-lane column tiling with a partial
    # trailing block (the path large activations take), N = 1480 = 11*128 + 72.
    B, S, D = 4, 37, 40
    x = jax.random.normal(k3, (B, S, D), dtype=jnp.float32)
    pe = make_positional_encoding(D, max_len=MAX_LEN, dtype=x.dtype)
    out = jax.block_until_ready(
        fwd(x, prepare_pe(pe, S, x.dtype), vmem_target_bytes=32 * 1024))
    assert jnp.allclose(out, x + pe[:S, :], atol=1e-6, rtol=1e-6), "test3 mismatch"

    print("KERNEL_OK")
</pallas_src>

<mosaic_0001>
module attributes {stable_mosaic.version = 11 : i64} {
  func.func @_pe_add_kernel(%arg0: i32, %arg1: i32, %arg2: memref<2x256xf32, #tpu.memory_space<vmem>>, %arg3: memref<1x256xf32, #tpu.memory_space<vmem>>, %arg4: memref<2x256xf32, #tpu.memory_space<vmem>>) attributes {dimension_semantics = [#tpu.dimension_semantics<parallel>, #tpu.dimension_semantics<parallel>], iteration_bounds = array<i64: 1, 1>, scalar_prefetch = 0 : i64, scratch_operands = 0 : i64, tpu.core_type = #tpu.core_type<tc>, window_params = [{transform_indices = @transform_0, window_bounds = array<i64: 2, 256>}, {transform_indices = @transform_1, window_bounds = array<i64: 1, 256>}, {transform_indices = @transform_2, window_bounds = array<i64: 2, 256>}]} {
    %c0 = arith.constant 0 : index
    %c0_0 = arith.constant 0 : index
    %0 = vector.load %arg2[%c0, %c0_0] : memref<2x256xf32, #tpu.memory_space<vmem>>, vector<2x256xf32>
    %c0_1 = arith.constant 0 : index
    %c0_2 = arith.constant 0 : index
    %1 = vector.load %arg3[%c0_1, %c0_2] : memref<1x256xf32, #tpu.memory_space<vmem>>, vector<1x256xf32>
    %2 = vector.broadcast %1 : vector<1x256xf32> to vector<2x256xf32>
    %3 = arith.addf %0, %2 : vector<2x256xf32>
    %c0_3 = arith.constant 0 : index
    %c0_4 = arith.constant 0 : index
    %4 = vector.load %arg4[%c0_3, %c0_4] : memref<2x256xf32, #tpu.memory_space<vmem>>, vector<2x256xf32>
    tpu.vector_store %arg4[%c0_3, %c0_4], %3 {strides = array<i32>} : memref<2x256xf32, #tpu.memory_space<vmem>>, vector<2x256xf32>,
    return
  }
  func.func @transform_0(%arg0: i32, %arg1: i32) -> (i32, i32) {
    %c0_i32 = arith.constant 0 : i32
    return %arg1, %arg0 : i32, i32
  }
  func.func @transform_1(%arg0: i32, %arg1: i32) -> (i32, i32) {
    %c0_i32 = arith.constant 0 : i32
    %c0_i32_0 = arith.constant 0 : i32
    return %c0_i32, %arg0 : i32, i32
  }
  func.func @transform_2(%arg0: i32, %arg1: i32) -> (i32, i32) {
    %c0_i32 = arith.constant 0 : i32
    return %arg1, %arg0 : i32, i32
  }
}

</mosaic_0001>

<llo_original>
// kernel: positional_encoding_forward.1
$region0: #{positional_encoding_forward.1}
  #allocation0 [shape = 'u32[]', space=smem, size = 0x4, offset = 0x4, fixed_abs, tag = 'smem constant byte address 0x4 - core index']
  #allocation1 [shape = 'u32[144,128]{1,0:T(1,128)}', space=vmem, size = 0x12000, scoped, tag = 'internal scratch']
  %s0 = inlined_call_operand.vmem [shape: f32[2,256], index: 0, kind: input, shape index: {}]
  %s1 = inlined_call_operand.vmem [shape: f32[1,256], index: 1, kind: input, shape index: {}]
  %s2 = inlined_call_operand.vmem [shape: f32[2,256], index: 2, kind: output, shape index: {}]
  %s3 = sld [smem:[#allocation0]]
  $region18: #{positional_encoding_forward.1} parent=0
    _
  %s5 = ssub.s32 1, %s3
  %s6 = scalar_select 0, %s5, %s3
  // Predicated region
  $region2: #{positional_encoding_forward.1} parent=0 // pred_check
    _
  $region3: #{positional_encoding_forward.1} parent=0 // pred_check_branch
    %8 = sbr.rel (0) target = $region5
  $region4: #{positional_encoding_forward.1} parent=0 // pred_region
    _
  $region5: #{positional_encoding_forward.1} parent=0 // pred_fallthru
    _
  // Predicated region
  $region6: #{positional_encoding_forward.1} parent=0 // pred_check
    _
  $region7: #{positional_encoding_forward.1} parent=0 // pred_check_branch
    %10 = sbr.rel (0) target = $region9
  $region8: #{positional_encoding_forward.1} parent=0 // pred_region
    _
  $region9: #{positional_encoding_forward.1} parent=0 // pred_fallthru
    _
  %v11 = vld [vmem:[%s0] sm:$0xf]
  %v12 = vld [vmem:[%s1] sm:$0x3]
  %v14 = vlaneseq
  %v15 = vshrl.u32 %v14, 7
  %v16 = vsub.s32 0, %v15
  %v17 = vrot.slane %v12, %v16
  %v18 = vlaneseq
  %v19 = vshrl.u32 %v18, 7
  %v20 = vsub.s32 1, %v19
  %v21 = vrot.slane %v12, %v20
  %v22 = vcombine.low %v17, %v21
  %v24 = vunpack.c.l.s4 1983009808
  %v25 = vunpack.c.0.s8 %v24
  %v26 = vlaneseq
  %v27 = vshrl.u32 %v26, 7
  %v28 = vsub.s32 %v25, %v27
  %v29 = vrot.slane %v22, %v28
  %v31 = vadd.f32 %v11, %v29
  %32 = vst [vmem:[%s2] sm:$0xf] %v31
  // Predicated region
  $region10: #{positional_encoding_forward.1} parent=0 // pred_check
    _
  $region11: #{positional_encoding_forward.1} parent=0 // pred_check_branch
    %34 = sbr.rel (0) target = $region13
  $region12: #{positional_encoding_forward.1} parent=0 // pred_region
    _
  $region13: #{positional_encoding_forward.1} parent=0 // pred_fallthru
    _
  // Predicated region
  $region14: #{positional_encoding_forward.1} parent=0 // pred_check
    _
  $region15: #{positional_encoding_forward.1} parent=0 // pred_check_branch
    %36 = sbr.rel (0) target = $region17
  $region16: #{positional_encoding_forward.1} parent=0 // pred_region
    _
  $region17: #{positional_encoding_forward.1} parent=0 // pred_fallthru
    _

</llo_original>
